<compile_context>
chip_gen: v7x
topology: tpu7x:2x2x1
jax: 0.10.0
libtpu: 0.0.40
codegen_flags: <defaults>
</compile_context>

<pallas_src>
import functools

import jax
import jax.numpy as jnp
from jax.experimental import pallas as pl
from jax.experimental.pallas import tpu as pltpu

LANES = 128
# 4096 x 128 f32 = 2 MiB per input block (multiple of 32 rows, so packed
# target dtypes also satisfy the sublane tiling constraint).
MAX_BLOCK_ROWS = 4096
# Leading "parallel" grid axis: shards the HBM stream across both TensorCores
# on v7x; one extra cheap outer iteration on single-TC v5e / v6e.
NUM_CORE_SPLITS = 2


def _round_up(x, m):
    return ((x + m - 1) // m) * m


def _focal_kernel(p_ref, t_ref, o_ref, acc_ref, *, n_valid, block_elems,
                  steps_per_core):
    c = pl.program_id(0)          # core-split ("parallel") axis
    s = pl.program_id(1)          # reduction ("arbitrary") axis

    @pl.when(s == 0)
    def _():
        acc_ref[...] = jnp.zeros_like(acc_ref)

    p = p_ref[...].astype(jnp.float32)
    t = t_ref[...].astype(jnp.float32)

    # PyTorch binary_cross_entropy clamps the log terms at -100.  The two-log
    # form keeps exact semantics for soft (non-{0,1}) targets.
    # TODO(synk): for hard {0,1} targets a single-log form
    #   q = t*p + (1-t)*(1-p); bce = -max(log(q), -100)
    # halves EUP pressure (matters on v7x once both TCs stream from HBM).
    log_p = jnp.maximum(jnp.log(p), -100.0)
    log_1mp = jnp.maximum(jnp.log(1.0 - p), -100.0)
    bce = -(t * log_p + (1.0 - t) * log_1mp)

    # Global element offset of this block (unclamped, so trailing fully
    # out-of-range blocks of the core-split grid contribute exactly zero).
    gb = c * steps_per_core + s
    block_start = gb * block_elems
    needs_mask = block_start + block_elems > n_valid

    @pl.when(jnp.logical_not(needs_mask))
    def _():
        acc_ref[...] += bce

    @pl.when(needs_mask)
    def _():
        row = jax.lax.broadcasted_iota(jnp.int32, bce.shape, 0)
        lane = jax.lax.broadcasted_iota(jnp.int32, bce.shape, 1)
        gidx = block_start + row * LANES + lane
        acc_ref[...] += jnp.where(gidx < n_valid, bce, 0.0)

    @pl.when(s == steps_per_core - 1)
    def _():
        partial = jnp.sum(acc_ref[...])
        # Full (1, 8, 128) splat store -> unmasked, lane-dense output block.
        o_ref[...] = jnp.zeros(o_ref.shape, jnp.float32) + partial


def focal_loss(inputs, targets, alpha=0.8, gamma=2, smooth=1):
    """Pallas TPU focal loss.  `inputs` are probabilities in [0, 1].

    `targets` may be any real/bool dtype (bool / int8 / bf16 / f32); the cast
    to f32 happens in-kernel, so narrow targets directly reduce HBM traffic on
    this memory-bound kernel.
    """
    del smooth  # unused in the reference forward

    p = jnp.reshape(inputs, (-1,))
    t = jnp.reshape(targets, (-1,))
    n_valid = p.shape[0]

    # Free reshape to a lane-dense (rows, 128) view.  Only when the element
    # count is not a multiple of 128 do we pay a pad copy; padded values are
    # masked inside the kernel so they are arbitrary.
    # TODO(synk): a 1-D block layout would remove this copy for n % 128 != 0.
    if n_valid % LANES:
        pad = _round_up(n_valid, LANES) - n_valid
        p = jnp.pad(p, (0, pad), constant_values=0.5)
        t = jnp.pad(t, (0, pad), constant_values=0)
    rows = p.shape[0] // LANES
    p2 = p.reshape(rows, LANES)
    t2 = t.reshape(rows, LANES)

    # Block: the full array if it fits (always a legal block shape), else a
    # large 4096-row tile.
    block_rows = rows if rows <= MAX_BLOCK_ROWS else MAX_BLOCK_ROWS
    block_elems = block_rows * LANES
    num_blocks = pl.cdiv(rows, block_rows)
    num_par = min(NUM_CORE_SPLITS, num_blocks)
    steps_per_core = pl.cdiv(num_blocks, num_par)

    def block_index(c, s):
        # Clamp so trailing (fully masked) iterations still read in-bounds.
        return (jnp.minimum(c * steps_per_core + s, num_blocks - 1), 0)

    kernel = functools.partial(
        _focal_kernel,
        n_valid=n_valid,
        block_elems=block_elems,
        steps_per_core=steps_per_core,
    )

    n_elems = rows * LANES
    cost = pl.CostEstimate(
        flops=10 * n_elems,
        transcendentals=2 * n_elems,
        bytes_accessed=(
            p2.size * p2.dtype.itemsize
            + t2.size * t2.dtype.itemsize
            + num_par * 8 * LANES * 4
        ),
    )

    partials = pl.pallas_call(
        kernel,
        out_shape=jax.ShapeDtypeStruct((num_par, 8, LANES), jnp.float32),
        grid_spec=pltpu.PrefetchScalarGridSpec(
            num_scalar_prefetch=0,
            grid=(num_par, steps_per_core),
            in_specs=[
                pl.BlockSpec((block_rows, LANES), block_index),
                pl.BlockSpec((block_rows, LANES), block_index),
            ],
            out_specs=pl.BlockSpec((1, 8, LANES), lambda c, s: (c, 0, 0)),
            scratch_shapes=[pltpu.VMEM((block_rows, LANES), jnp.float32)],
        ),
        compiler_params=pltpu.CompilerParams(
            dimension_semantics=("parallel", "arbitrary"),
        ),
        cost_estimate=cost,
    )(p2, t2)

    # Tiny scalar epilogue on the per-core partial sums.
    total_bce = jnp.sum(partials[:, 0, 0])
    mean_bce = total_bce / jnp.float32(n_valid)
    bce_exp = jnp.exp(-mean_bce)
    return alpha * (1.0 - bce_exp) ** gamma * mean_bce


def focal_loss_ref(inputs, targets, alpha=0.8, gamma=2):
    p = jnp.reshape(inputs, (-1,)).astype(jnp.float32)
    t = jnp.reshape(targets, (-1,)).astype(jnp.float32)
    log_p = jnp.maximum(jnp.log(p), -100.0)
    log_1mp = jnp.maximum(jnp.log(1.0 - p), -100.0)
    bce = jnp.mean(-(t * log_p + (1.0 - t) * log_1mp))
    return alpha * (1.0 - jnp.exp(-bce)) ** gamma * bce


if __name__ == "__main__":
    key = jax.random.PRNGKey(0)
    k1, k2 = jax.random.split(key)
    # NCHW-shaped probabilities (e.g. sigmoid outputs) and binary targets.
    x = jax.random.uniform(k1, (2, 4, 16, 16), jnp.float32, 1e-3, 1.0 - 1e-3)
    y = (jax.random.uniform(k2, (2, 4, 16, 16), jnp.float32) > 0.5).astype(
        jnp.float32
    )

    out = focal_loss(x, y)
    out = jax.block_until_ready(out)

    ref = focal_loss_ref(x, y)
    assert jnp.allclose(out, ref, rtol=1e-5, atol=1e-6), (out, ref)
    print("KERNEL_OK")
</pallas_src>

<mosaic_0001>
module attributes {stable_mosaic.version = 11 : i64} {
  func.func @_focal_kernel(%arg0: i32, %arg1: i32, %arg2: memref<16x128xf32, #tpu.memory_space<vmem>>, %arg3: memref<16x128xf32, #tpu.memory_space<vmem>>, %arg4: memref<1x8x128xf32, #tpu.memory_space<vmem>>, %arg5: memref<16x128xf32, #tpu.memory_space<vmem>>) attributes {dimension_semantics = [#tpu.dimension_semantics<parallel>, #tpu.dimension_semantics<arbitrary>], iteration_bounds = array<i64: 1, 1>, scalar_prefetch = 0 : i64, scratch_operands = 1 : i64, tpu.core_type = #tpu.core_type<tc>, window_params = [{transform_indices = @transform_0, window_bounds = array<i64: 16, 128>}, {transform_indices = @transform_1, window_bounds = array<i64: 16, 128>}, {transform_indices = @transform_2, window_bounds = array<i64: 1, 8, 128>}]} {
    %c0_i32 = arith.constant 0 : i32
    %0 = arith.cmpi eq, %arg1, %c0_i32 : i32
    %1 = arith.extui %0 : i1 to i32
    %c0_i32_0 = arith.constant 0 : i32
    %2 = arith.cmpi ne, %1, %c0_i32_0 : i32
    scf.if %2 {
      %cst_14 = arith.constant 0.000000e+00 : f32
      %33 = vector.broadcast %cst_14 : f32 to vector<16x128xf32>
      %c0_15 = arith.constant 0 : index
      %c0_16 = arith.constant 0 : index
      %34 = vector.load %arg5[%c0_15, %c0_16] : memref<16x128xf32, #tpu.memory_space<vmem>>, vector<16x128xf32>
      tpu.vector_store %arg5[%c0_15, %c0_16], %33 {strides = array<i32>} : memref<16x128xf32, #tpu.memory_space<vmem>>, vector<16x128xf32>,
    } else {
    }
    %c0 = arith.constant 0 : index
    %c0_1 = arith.constant 0 : index
    %3 = vector.load %arg2[%c0, %c0_1] : memref<16x128xf32, #tpu.memory_space<vmem>>, vector<16x128xf32>
    %c0_2 = arith.constant 0 : index
    %c0_3 = arith.constant 0 : index
    %4 = vector.load %arg3[%c0_2, %c0_3] : memref<16x128xf32, #tpu.memory_space<vmem>>, vector<16x128xf32>
    %5 = math.log %3 : vector<16x128xf32>
    %cst = arith.constant -1.000000e+02 : f32
    %6 = vector.broadcast %cst : f32 to vector<16x128xf32>
    %7 = arith.maximumf %5, %6 : vector<16x128xf32>
    %cst_4 = arith.constant 1.000000e+00 : f32
    %8 = vector.broadcast %cst_4 : f32 to vector<16x128xf32>
    %9 = arith.subf %8, %3 : vector<16x128xf32>
    %10 = math.log %9 : vector<16x128xf32>
    %cst_5 = arith.constant -1.000000e+02 : f32
    %11 = vector.broadcast %cst_5 : f32 to vector<16x128xf32>
    %12 = arith.maximumf %10, %11 : vector<16x128xf32>
    %13 = arith.mulf %4, %7 : vector<16x128xf32>
    %cst_6 = arith.constant 1.000000e+00 : f32
    %14 = vector.broadcast %cst_6 : f32 to vector<16x128xf32>
    %15 = arith.subf %14, %4 : vector<16x128xf32>
    %16 = arith.mulf %15, %12 : vector<16x128xf32>
    %17 = arith.addf %13, %16 : vector<16x128xf32>
    %cst_7 = arith.constant 0.000000e+00 : f32
    %18 = vector.broadcast %cst_7 : f32 to vector<16x128xf32>
    %19 = arith.subf %18, %17 : vector<16x128xf32>
    %c1_i32 = arith.constant 1 : i32
    %20 = arith.muli %arg0, %c1_i32 : i32
    %21 = arith.addi %20, %arg1 : i32
    %c2048_i32 = arith.constant 2048 : i32
    %22 = arith.muli %21, %c2048_i32 : i32
    %c2048_i32_8 = arith.constant 2048 : i32
    %23 = arith.addi %22, %c2048_i32_8 : i32
    %c2048_i32_9 = arith.constant 2048 : i32
    %24 = arith.cmpi sgt, %23, %c2048_i32_9 : i32
    %true = arith.constant true
    %25 = arith.xori %24, %true : i1
    %26 = arith.extui %25 : i1 to i32
    %c0_i32_10 = arith.constant 0 : i32
    %27 = arith.cmpi ne, %26, %c0_i32_10 : i32
    scf.if %27 {
      %c0_14 = arith.constant 0 : index
      %c0_15 = arith.constant 0 : index
      %33 = vector.load %arg5[%c0_14, %c0_15] : memref<16x128xf32, #tpu.memory_space<vmem>>, vector<16x128xf32>
      %34 = arith.addf %33, %19 : vector<16x128xf32>
      %c0_16 = arith.constant 0 : index
      %c0_17 = arith.constant 0 : index
      %35 = vector.load %arg5[%c0_16, %c0_17] : memref<16x128xf32, #tpu.memory_space<vmem>>, vector<16x128xf32>
      tpu.vector_store %arg5[%c0_16, %c0_17], %34 {strides = array<i32>} : memref<16x128xf32, #tpu.memory_space<vmem>>, vector<16x128xf32>,
    } else {
    }
    %28 = arith.extui %24 : i1 to i32
    %c0_i32_11 = arith.constant 0 : i32
    %29 = arith.cmpi ne, %28, %c0_i32_11 : i32
    scf.if %29 {
      %33 = tpu.iota {dimensions = array<i32: 0>} : vector<16x128xi32>
      %34 = tpu.iota {dimensions = array<i32: 1>} : vector<16x128xi32>
      %c128_i32 = arith.constant 128 : i32
      %35 = vector.broadcast %c128_i32 : i32 to vector<16x128xi32>
      %36 = arith.muli %33, %35 : vector<16x128xi32>
      %37 = vector.broadcast %22 : i32 to vector<16x128xi32>
      %38 = arith.addi %37, %36 : vector<16x128xi32>
      %39 = arith.addi %38, %34 : vector<16x128xi32>
      %c0_14 = arith.constant 0 : index
      %c0_15 = arith.constant 0 : index
      %40 = vector.load %arg5[%c0_14, %c0_15] : memref<16x128xf32, #tpu.memory_space<vmem>>, vector<16x128xf32>
      %c2048_i32_16 = arith.constant 2048 : i32
      %41 = vector.broadcast %c2048_i32_16 : i32 to vector<16x128xi32>
      %42 = arith.cmpi slt, %39, %41 : vector<16x128xi32>
      %cst_17 = arith.constant 0.000000e+00 : f32
      %43 = vector.broadcast %cst_17 : f32 to vector<16x128xf32>
      %44 = arith.select %42, %19, %43 : vector<16x128xi1>, vector<16x128xf32>
      %45 = arith.addf %40, %44 : vector<16x128xf32>
      %c0_18 = arith.constant 0 : index
      %c0_19 = arith.constant 0 : index
      %46 = vector.load %arg5[%c0_18, %c0_19] : memref<16x128xf32, #tpu.memory_space<vmem>>, vector<16x128xf32>
      tpu.vector_store %arg5[%c0_18, %c0_19], %45 {strides = array<i32>} : memref<16x128xf32, #tpu.memory_space<vmem>>, vector<16x128xf32>,
    } else {
    }
    %c0_i32_12 = arith.constant 0 : i32
    %30 = arith.cmpi eq, %arg1, %c0_i32_12 : i32
    %31 = arith.extui %30 : i1 to i32
    %c0_i32_13 = arith.constant 0 : i32
    %32 = arith.cmpi ne, %31, %c0_i32_13 : i32
    scf.if %32 {
      %c0_14 = arith.constant 0 : index
      %c0_15 = arith.constant 0 : index
      %33 = vector.load %arg5[%c0_14, %c0_15] : memref<16x128xf32, #tpu.memory_space<vmem>>, vector<16x128xf32>
      %34 = vector.shape_cast %33 : vector<16x128xf32> to vector<1x16x128xf32>
      %cst_16 = arith.constant dense<0.000000e+00> : vector<1xf32>
      %35 = vector.multi_reduction <add>, %34, %cst_16 [1, 2] : vector<1x16x128xf32> to vector<1xf32>
      %36 = vector.shape_cast %35 : vector<1xf32> to vector<1x1x1xf32>
      %37 = vector.extract %36[0, 0, 0] : f32 from vector<1x1x1xf32>
      %cst_17 = arith.constant 0.000000e+00 : f32
      %38 = vector.broadcast %cst_17 : f32 to vector<1x8x128xf32>
      %39 = vector.broadcast %37 : f32 to vector<1x8x128xf32>
      %40 = arith.addf %38, %39 : vector<1x8x128xf32>
      %c0_18 = arith.constant 0 : index
      %c0_19 = arith.constant 0 : index
      %c0_20 = arith.constant 0 : index
      %41 = vector.load %arg4[%c0_18, %c0_19, %c0_20] : memref<1x8x128xf32, #tpu.memory_space<vmem>>, vector<1x8x128xf32>
      tpu.vector_store %arg4[%c0_18, %c0_19, %c0_20], %40 {strides = array<i32>} : memref<1x8x128xf32, #tpu.memory_space<vmem>>, vector<1x8x128xf32>,
    } else {
    }
    return
  }
  func.func @transform_0(%arg0: i32, %arg1: i32) -> (i32, i32) {
    %c1_i32 = arith.constant 1 : i32
    %0 = arith.muli %arg0, %c1_i32 : i32
    %1 = arith.addi %0, %arg1 : i32
    %c0_i32 = arith.constant 0 : i32
    %2 = arith.minsi %1, %c0_i32 : i32
    %c0_i32_0 = arith.constant 0 : i32
    %c0_i32_1 = arith.constant 0 : i32
    return %2, %c0_i32_0 : i32, i32
  }
  func.func @transform_1(%arg0: i32, %arg1: i32) -> (i32, i32) {
    %c1_i32 = arith.constant 1 : i32
    %0 = arith.muli %arg0, %c1_i32 : i32
    %1 = arith.addi %0, %arg1 : i32
    %c0_i32 = arith.constant 0 : i32
    %2 = arith.minsi %1, %c0_i32 : i32
    %c0_i32_0 = arith.constant 0 : i32
    %c0_i32_1 = arith.constant 0 : i32
    return %2, %c0_i32_0 : i32, i32
  }
  func.func @transform_2(%arg0: i32, %arg1: i32) -> (i32, i32, i32) {
    %c0_i32 = arith.constant 0 : i32
    %c0_i32_0 = arith.constant 0 : i32
    %c0_i32_1 = arith.constant 0 : i32
    return %arg0, %c0_i32, %c0_i32_0 : i32, i32, i32
  }
}

</mosaic_0001>

<llo_original>
// kernel: tpu_custom_call.1
$region0: #{tpu_custom_call.1}
  #allocation0 [shape = 'u32[]', space=smem, size = 0x4, offset = 0x4, fixed_abs, tag = 'smem constant byte address 0x4 - core index']
  #allocation1 [shape = 'u32[144,128]{1,0:T(1,128)}', space=vmem, size = 0x12000, scoped, tag = 'internal scratch']
  #allocation2 [shape = 'f32[16,128]{1,0:T(8,128)}', space=vmem, size = 0x2000, scoped, tag = 'scratch operand']
  %s0 = inlined_call_operand.hbm [shape: f32[16,128], index: 0, kind: input, shape index: {}]
  %s1 = inlined_call_operand.hbm [shape: f32[16,128], index: 1, kind: input, shape index: {}]
  %s2 = inlined_call_operand.hbm [shape: f32[1,8,128], index: 2, kind: output, shape index: {}]
  %s3 = sld [smem:[#allocation0]]
  $region42: #{tpu_custom_call.1} parent=0
    _
  %s5 = ssub.s32 1, %s3
  %s6 = scalar_select 0, %s5, %s3
  $region1: #{tpu_custom_call.1} parent=0
    #allocation3 [shape = 'u8[8192]{0}', space=vmem, size = 0x2000, scoped, tag = 'input window, operand 0, single buffered']
    #allocation4 [shape = 's32[1]{0}', space=sflag, size = 0x4, scoped, tag = 'scoped memory for tpu_custom_call.1']
    #allocation5 [shape = 's32[1]{0}', space=sflag, size = 0x4, scoped, tag = 'scoped memory for tpu_custom_call.1']
    #allocation6 [shape = 'u8[8192]{0}', space=vmem, size = 0x2000, scoped, tag = 'input window, operand 1, single buffered']
    #allocation7 [shape = 's32[1]{0}', space=sflag, size = 0x4, scoped, tag = 'scoped memory for tpu_custom_call.1']
    #allocation8 [shape = 'u8[4096]{0}', space=vmem, size = 0x1000, scoped, tag = 'output window, operand 0, single buffered']
    %7 = vsyncpa [#allocation4], 0
    %8 = vsyncpa [#allocation7], 0
    %9 = vsyncpa [#allocation5], 0
    // Predicated region
    $region2: #{tpu_custom_call.1} parent=1 // pred_check
      _
    $region3: #{tpu_custom_call.1} parent=1 // pred_check_branch
      %11 = sbr.rel (0) target = $region5
    $region4: #{tpu_custom_call.1} parent=1 // pred_region
      %s12 = sadd.s32 0, 0
      %p13 = scmp.lt.s32.totalorder %s12, 0
      %s14 = scalar_select %p13, %s12, 0
      %s15 = smul.u32 2, %s14
      %s17 = ssub.s32 256, 256
      %18 = vsyncadd [#allocation4], %s17
      %s19 = smul.addr %s15, 128
      %s20 = scalar_lea.hbm %s0, %s19
      %s21 = sshll.u32 [#allocation3], 4
      %s22 = int_to_ptr.vmem [resolvable:$true] %s21
      %27 = dma.hbm_to_vmem [thread:$0]  %s20, 256, %s22, [#allocation4], 128, 128, 8
    $region5: #{tpu_custom_call.1} parent=1 // pred_fallthru
      _
    // Predicated region
    $region6: #{tpu_custom_call.1} parent=1 // pred_check
      _
    $region7: #{tpu_custom_call.1} parent=1 // pred_check_branch
      %29 = sbr.rel (0) target = $region9
    $region8: #{tpu_custom_call.1} parent=1 // pred_region
      %s30 = sadd.s32 0, 0
      %p31 = scmp.lt.s32.totalorder %s30, 0
      %s32 = scalar_select %p31, %s30, 0
      %s33 = smul.u32 2, %s32
      %s35 = ssub.s32 256, 256
      %36 = vsyncadd [#allocation7], %s35
      %s37 = smul.addr %s33, 128
      %s38 = scalar_lea.hbm %s1, %s37
      %s39 = sshll.u32 [#allocation6], 4
      %s40 = int_to_ptr.vmem [resolvable:$true] %s39
      %45 = dma.hbm_to_vmem [thread:$0]  %s38, 256, %s40, [#allocation7], 128, 128, 8
    $region9: #{tpu_custom_call.1} parent=1 // pred_fallthru
      _
    // Predicated region
    $region10: #{tpu_custom_call.1} parent=1 // pred_check
      _
    $region11: #{tpu_custom_call.1} parent=1 // pred_check_branch
      %47 = sbr.rel (0) target = $region13
    $region12: #{tpu_custom_call.1} parent=1 // pred_region
      %48 = dma.done [#allocation4], 256
    $region13: #{tpu_custom_call.1} parent=1 // pred_fallthru
      _
    // Predicated region
    $region14: #{tpu_custom_call.1} parent=1 // pred_check
      _
    $region15: #{tpu_custom_call.1} parent=1 // pred_check_branch
      %50 = sbr.rel (0) target = $region17
    $region16: #{tpu_custom_call.1} parent=1 // pred_region
      %51 = dma.done [#allocation7], 256
    $region17: #{tpu_custom_call.1} parent=1 // pred_fallthru
      _
    %s52 = sadd.s32 0, 0
    %p53 = scmp.lt.s32.totalorder %s52, 0
    %s54 = scalar_select %p53, %s52, 0
    %s55 = smul.u32 2, %s54
    %s56 = sadd.s32 0, 0
    %p57 = scmp.lt.s32.totalorder %s56, 0
    %s58 = scalar_select %p57, %s56, 0
    %s59 = smul.u32 2, %s58
    %p60 = scmp.eq.s32.totalorder 0, 0
    // Predicated region
    $region18: #{tpu_custom_call.1} parent=1 // pred_check
      %p61 = pneg %p60
    $region19: #{tpu_custom_call.1} parent=1 // pred_check_branch
      %63 = sbr.rel (%p61) target = $region21
    $region20: #{tpu_custom_call.1} parent=1 // pred_region
      %64 = vst [vmem:[#allocation2] sm:$0xff] 0.0
      %65 = vst [vmem:[#allocation2 + $0x8] sm:$0xff] 0.0
    $region21: #{tpu_custom_call.1} parent=1 // pred_fallthru
      _
    %v66 = vld [vmem:[#allocation3] sm:$0xff]
    %v67 = vld [vmem:[#allocation3 + $0x8] sm:$0xff]
    %v68 = vld [vmem:[#allocation6] sm:$0xff]
    %v69 = vld [vmem:[#allocation6 + $0x8] sm:$0xff]
    %v70 = vlog2.pop %v66
    %v71 = vmul.f32 %v70, 0.6931472
    %v72 = vlog2.pop %v67
    %v73 = vmul.f32 %v72, 0.6931472
    %v74 = vmax.f32 %v71, -100.0
    %v75 = vmax.f32 %v73, -100.0
    %v76 = vsub.f32 1.0, %v66
    %v77 = vsub.f32 1.0, %v67
    %v78 = vlog2.pop %v76
    %v79 = vmul.f32 %v78, 0.6931472
    %v80 = vlog2.pop %v77
    %v81 = vmul.f32 %v80, 0.6931472
    %v82 = vmax.f32 %v79, -100.0
    %v83 = vmax.f32 %v81, -100.0
    %v84 = vmul.f32 %v68, %v74
    %v85 = vmul.f32 %v69, %v75
    %v86 = vsub.f32 1.0, %v68
    %v87 = vsub.f32 1.0, %v69
    %v88 = vmul.f32 %v86, %v82
    %v89 = vmul.f32 %v87, %v83
    %v90 = vadd.f32 %v84, %v88
    %v91 = vadd.f32 %v85, %v89
    %v92 = vsub.f32 0.0, %v90
    %v93 = vsub.f32 0.0, %v91
    %s94 = sadd.s32 0, 0
    %s95 = smul.u32 %s94, 2048
    %s96 = sadd.s32 %s95, 2048
    %p97 = scmp.gt.s32.totalorder %s96, 2048
    %p98 = scmp.le.s32.totalorder %s96, 2048
    // Predicated region
    $region22: #{tpu_custom_call.1} parent=1 // pred_check
      %p99 = pneg %p98
    $region23: #{tpu_custom_call.1} parent=1 // pred_check_branch
      %101 = sbr.rel (%p99) target = $region25
    $region24: #{tpu_custom_call.1} parent=1 // pred_region
      %v102 = vld [vmem:[#allocation2] sm:$0xff]
      %v103 = vld [vmem:[#allocation2 + $0x8] sm:$0xff]
      %v104 = vadd.f32 %v102, %v92
      %v105 = vadd.f32 %v103, %v93
      %106 = vst [vmem:[#allocation2] sm:$0xff] %v104
      %107 = vst [vmem:[#allocation2 + $0x8] sm:$0xff] %v105
    $region25: #{tpu_custom_call.1} parent=1 // pred_fallthru
      _
    // Predicated region
    $region26: #{tpu_custom_call.1} parent=1 // pred_check
      %p108 = pneg %p97
    $region27: #{tpu_custom_call.1} parent=1 // pred_check_branch
      %110 = sbr.rel (%p108) target = $region29
    $region28: #{tpu_custom_call.1} parent=1 // pred_region
      %v111 = vlaneseq
      %v112 = vshrl.u32 %v111, 7
      %v113 = vadd.s32 %v112, 8
      %v114 = vlaneseq
      %v115 = vand.u32 %v114, 127
      %v116 = vmul.u32 %v112, 128
      %v117 = vmul.u32 %v113, 128
      %v118 = vstv %s95
      %v119 = vadd.s32 %v118, %v116
      %v120 = vadd.s32 %v118, %v117
      %v121 = vadd.s32 %v119, %v115
      %v122 = vadd.s32 %v120, %v115
      %v123 = vld [vmem:[#allocation2] sm:$0xff]
      %v124 = vld [vmem:[#allocation2 + $0x8] sm:$0xff]
      %vm125 = vcmp.lt.s32.totalorder %v121, 2048
      %vm126 = vcmp.lt.s32.totalorder %v122, 2048
      %v127 = vsel %vm125, %v92, 0.0
      %v128 = vsel %vm126, %v93, 0.0
      %v129 = vadd.f32 %v123, %v127
      %v130 = vadd.f32 %v124, %v128
      %131 = vst [vmem:[#allocation2] sm:$0xff] %v129
      %132 = vst [vmem:[#allocation2 + $0x8] sm:$0xff] %v130
    $region29: #{tpu_custom_call.1} parent=1 // pred_fallthru
      _
    // Predicated region
    $region30: #{tpu_custom_call.1} parent=1 // pred_check
      %p133 = pneg %p60
    $region31: #{tpu_custom_call.1} parent=1 // pred_check_branch
      %135 = sbr.rel (%p133) target = $region33
    $region32: #{tpu_custom_call.1} parent=1 // pred_region
      %v136 = vld [vmem:[#allocation2] sm:$0xff]
      %v137 = vld [vmem:[#allocation2 + $0x8] sm:$0xff]
      %v138 = vadd.f32 %v136, %v137
      %139 = vadd.xlane.f32.xlu0 %v138
      %v140 = vpop.xlane.xlu0 %139
      %v141 = vrot.slane %v140, 4
      %v142 = vadd.f32 %v140, %v141
      %v143 = vrot.slane %v142, 2
      %v144 = vadd.f32 %v142, %v143
      %v145 = vrot.slane %v144, 1
      %v146 = vadd.f32 %v144, %v145
      %s147 = vtos %v146
      %v148 = vstv %s147
      %v149 = vadd.f32 %v148, 0.0
      %150 = vst [vmem:[#allocation8] sm:$0xff] %v149
    $region33: #{tpu_custom_call.1} parent=1 // pred_fallthru
      _
    // Predicated region
    $region34: #{tpu_custom_call.1} parent=1 // pred_check
      _
    $region35: #{tpu_custom_call.1} parent=1 // pred_check_branch
      %152 = sbr.rel (0) target = $region37
    $region36: #{tpu_custom_call.1} parent=1 // pred_region
      %s154 = ssub.s32 128, 128
      %155 = vsyncadd [#allocation5], %s154
      %s157 = sshll.u32 [#allocation8], 4
      %s158 = int_to_ptr.vmem [resolvable:$true] %s157
      %160 = dma.vmem_to_hbm [thread:$0]  %s158, 128, %s2, [#allocation5]
    $region37: #{tpu_custom_call.1} parent=1 // pred_fallthru
      _
    // Predicated region
    $region38: #{tpu_custom_call.1} parent=1 // pred_check
      _
    $region39: #{tpu_custom_call.1} parent=1 // pred_check_branch
      %162 = sbr.rel (0) target = $region41
    $region40: #{tpu_custom_call.1} parent=1 // pred_region
      %163 = dma.done [#allocation5], 128
    $region41: #{tpu_custom_call.1} parent=1 // pred_fallthru
      _
    %164 = vsyncpa [#allocation4], 1
    %165 = vsyncpa [#allocation7], 1
    %166 = vsyncpa [#allocation5], 1

</llo_original>
